<compile_context>
chip_gen: v7x
topology: tpu7x:2x2x1
jax: 0.10.0
libtpu: 0.0.40
codegen_flags: <defaults>
</compile_context>

<pallas_src>
import functools
import math

import jax
import jax.numpy as jnp
from jax import lax
from jax.experimental import pallas as pl
from jax.experimental.pallas import tpu as pltpu


def _sdpa_scores_kernel(q_ref, k_ref, o_ref, *, scale):
    # q_ref: (1, TQ, D) current q tile;  k_ref: (1, S, D) resident keys.
    # Fold 1/sqrt(D) into q (TQ*D multiplies) instead of the (TQ,S) scores.
    q = q_ref[0] * scale
    k = k_ref[0]
    # Contract on D of both operands -> (TQ, S); MXU consumes the
    # transposed-RHS form natively (no XLU transpose), f32 accumulation.
    s = lax.dot_general(
        q, k,
        dimension_numbers=(((1,), (1,)), ((), ())),
        preferred_element_type=jnp.float32,
    )
    # Row-wise numerically stable softmax; each q tile sees all S keys.
    m = jnp.max(s, axis=-1, keepdims=True)
    s = jnp.exp(s - m)                       # reuse buffer; pre-exp scores die here
    denom = jnp.sum(s, axis=-1, keepdims=True)
    o_ref[0] = (s * pl.reciprocal(denom, approx=False)).astype(o_ref.dtype)


def _vmem_budget_bytes():
    """~75% of physical VMEM (leaves headroom for Mosaic scratch / semaphores)."""
    cap = None
    try:
        cap = int(pltpu.get_tpu_info().vmem_capacity_bytes)
    except Exception:
        cap = None
    if not cap or cap <= 0:
        cap = 64 << 20  # conservative fallback = v7x per-core capacity
    return (cap * 3) // 4


def _est_vmem_bytes(tq, S, D, in_bytes, out_bytes):
    q = 2 * tq * D * in_bytes       # double-buffered q tile
    k = 1 * S * D * in_bytes        # single-buffered resident keys
    o = 2 * tq * S * out_bytes      # double-buffered output tile
    tmp = 2 * tq * S * 4            # f32 score matrix + softmax temporary
    return q + k + o + tmp


def _pick_tq(S, D, in_bytes, out_bytes, budget):
    """Largest q tile (multiple of 8, dividing S) whose VMEM estimate fits."""
    candidates = [t for t in (512, 256, 128, 64, 32, 16, 8) if S % t == 0]
    if not candidates:
        candidates = [S]  # tiny / irregular S: full block (full-extent dims are legal)
    for tq in candidates:
        if _est_vmem_bytes(tq, S, D, in_bytes, out_bytes) <= budget:
            return tq
    return candidates[-1]


def sdpa_scores(x1, x2, *, matmul_dtype=None, out_dtype=None):
    """softmax(x1 @ x2^T / sqrt(x2.shape[-1])) per batch, via Pallas.

    matmul_dtype: optionally cast q/k at the call boundary (e.g. jnp.bfloat16)
      for 2x MXU throughput and half the q/k HBM reads; accumulation stays f32.
    out_dtype: output dtype; defaults to x1.dtype (bf16 in -> bf16 out).
    """
    assert x1.ndim == 3 and x2.ndim == 3
    B, S, D = x1.shape
    assert x2.shape == (B, S, D)

    inv_scale = math.sqrt(x2.shape[-1])  # matches the reference forward
    scale = 1.0 / inv_scale

    if out_dtype is None:
        out_dtype = x1.dtype
    if matmul_dtype is not None:
        # Boundary cast: halves HBM reads and the resident-k VMEM footprint.
        x1 = x1.astype(matmul_dtype)
        x2 = x2.astype(matmul_dtype)

    in_bytes = jnp.dtype(x1.dtype).itemsize
    out_bytes = jnp.dtype(out_dtype).itemsize

    budget = _vmem_budget_bytes()
    TQ = _pick_tq(S, D, in_bytes, out_bytes, budget)
    n_q_tiles = pl.cdiv(S, TQ)

    est = _est_vmem_bytes(TQ, S, D, in_bytes, out_bytes)
    # Always set the scoped-VMEM limit from the estimate (v5e default is only
    # 16 MiB), but never above the per-generation budget (v7x: 64 MiB phys).
    vmem_limit = int(min(budget, max(int(est * 1.5), 32 << 20)))

    kernel = functools.partial(_sdpa_scores_kernel, scale=scale)

    def build(k_single_buffer):
        k_spec_kwargs = {}
        if k_single_buffer:
            # k's block index is constant along the q-tile axis; one buffer
            # suffices and saves S*D*in_bytes of VMEM per step.
            k_spec_kwargs["pipeline_mode"] = pl.Buffered(1)
        return pl.pallas_call(
            kernel,
            out_shape=jax.ShapeDtypeStruct((B, S, S), out_dtype),
            grid_spec=pltpu.PrefetchScalarGridSpec(
                num_scalar_prefetch=0,
                grid=(B, n_q_tiles),
                in_specs=[
                    pl.BlockSpec((1, TQ, D), lambda b, i: (b, i, 0)),
                    pl.BlockSpec((1, S, D), lambda b, i: (b, 0, 0),
                                 **k_spec_kwargs),
                ],
                out_specs=pl.BlockSpec((1, TQ, S), lambda b, i: (b, i, 0)),
            ),
            compiler_params=pltpu.CompilerParams(
                dimension_semantics=("parallel", "parallel"),
                vmem_limit_bytes=vmem_limit,
            ),
        )

    try:
        return build(k_single_buffer=True)(x1, x2)
    except Exception:
        # Fall back to default double-buffering if Buffered(1) is rejected.
        return build(k_single_buffer=False)(x1, x2)


def sdpa_scores_ref(x1, x2):
    inv_scale = math.sqrt(x2.shape[-1])
    s = jnp.einsum("bsd,btd->bst", x1, x2) / inv_scale
    return jax.nn.softmax(s, axis=-1)


if __name__ == "__main__":
    key = jax.random.PRNGKey(0)
    k1, k2 = jax.random.split(key)
    B, S, D = 2, 8, 32
    x1 = jax.random.normal(k1, (B, S, D), dtype=jnp.float32)
    x2 = jax.random.normal(k2, (B, S, D), dtype=jnp.float32)

    out = sdpa_scores(x1, x2)
    jax.block_until_ready(out)

    ref = sdpa_scores_ref(x1, x2)
    assert out.shape == (B, S, S)
    assert out.dtype == x1.dtype
    assert jnp.allclose(out.astype(jnp.float32), ref, atol=1e-3, rtol=1e-3)

    print("KERNEL_OK")
</pallas_src>

<mosaic_0001>
module attributes {stable_mosaic.version = 11 : i64} {
  func.func @_sdpa_scores_kernel(%arg0: i32, %arg1: i32, %arg2: memref<1x8x32xf32, #tpu.memory_space<vmem>>, %arg3: memref<1x8x32xf32, #tpu.memory_space<vmem>>, %arg4: memref<1x8x8xf32, #tpu.memory_space<vmem>>) attributes {dimension_semantics = [#tpu.dimension_semantics<parallel>, #tpu.dimension_semantics<parallel>], iteration_bounds = array<i64: 2, 1>, scalar_prefetch = 0 : i64, scratch_operands = 0 : i64, tpu.core_type = #tpu.core_type<tc>, window_params = [{transform_indices = @transform_0, window_bounds = array<i64: 1, 8, 32>}, {pipeline_mode = #tpu.pipeline_mode<synchronous>, transform_indices = @transform_1, window_bounds = array<i64: 1, 8, 32>}, {transform_indices = @transform_2, window_bounds = array<i64: 1, 8, 8>}]} {
    %c0 = arith.constant 0 : index
    %c0_0 = arith.constant 0 : index
    %c0_1 = arith.constant 0 : index
    %0 = vector.load %arg2[%c0, %c0_0, %c0_1] : memref<1x8x32xf32, #tpu.memory_space<vmem>>, vector<1x8x32xf32>
    %1 = vector.shape_cast %0 : vector<1x8x32xf32> to vector<8x32xf32>
    %cst = arith.constant 0.176776692 : f32
    %2 = vector.broadcast %cst : f32 to vector<8x32xf32>
    %3 = arith.mulf %1, %2 : vector<8x32xf32>
    %c0_2 = arith.constant 0 : index
    %c0_3 = arith.constant 0 : index
    %c0_4 = arith.constant 0 : index
    %4 = vector.load %arg3[%c0_2, %c0_3, %c0_4] : memref<1x8x32xf32, #tpu.memory_space<vmem>>, vector<1x8x32xf32>
    %5 = vector.shape_cast %4 : vector<1x8x32xf32> to vector<8x32xf32>
    %cst_5 = arith.constant dense<0.000000e+00> : vector<8x8xf32>
    %6 = tpu.matmul %3, %5, %cst_5 {dimension_numbers = #tpu.dot_dimension_numbers<[1], [1], [0], [0], [0, 0, 1, 0], [], []>} : vector<8x32xf32>, vector<8x32xf32>, vector<8x8xf32> -> vector<8x8xf32>
    %cst_6 = arith.constant dense<0xFF800000> : vector<8xf32>
    %7 = vector.multi_reduction <maximumf>, %6, %cst_6 [1] : vector<8x8xf32> to vector<8xf32>
    %8 = vector.shape_cast %7 : vector<8xf32> to vector<8x1xf32>
    %9 = vector.broadcast %8 : vector<8x1xf32> to vector<8x8xf32>
    %10 = arith.subf %6, %9 : vector<8x8xf32>
    %11 = math.exp %10 : vector<8x8xf32>
    %cst_7 = arith.constant dense<0.000000e+00> : vector<8xf32>
    %12 = vector.multi_reduction <add>, %11, %cst_7 [1] : vector<8x8xf32> to vector<8xf32>
    %13 = vector.shape_cast %12 : vector<8xf32> to vector<8x1xf32>
    %14 = tpu.reciprocal %13 : vector<8x1xf32> -> vector<8x1xf32>
    %15 = vector.broadcast %14 : vector<8x1xf32> to vector<8x8xf32>
    %16 = arith.mulf %11, %15 : vector<8x8xf32>
    %c0_8 = arith.constant 0 : index
    %c0_9 = arith.constant 0 : index
    %c0_10 = arith.constant 0 : index
    %17 = vector.load %arg4[%c0_8, %c0_9, %c0_10] : memref<1x8x8xf32, #tpu.memory_space<vmem>>, vector<1x8x8xf32>
    %18 = vector.shape_cast %17 : vector<1x8x8xf32> to vector<8x8xf32>
    %19 = vector.shape_cast %16 : vector<8x8xf32> to vector<1x8x8xf32>
    tpu.vector_store %arg4[%c0_8, %c0_9, %c0_10], %19 {strides = array<i32>} : memref<1x8x8xf32, #tpu.memory_space<vmem>>, vector<1x8x8xf32>,
    return
  }
  func.func @transform_0(%arg0: i32, %arg1: i32) -> (i32, i32, i32) {
    %c0_i32 = arith.constant 0 : i32
    %c0_i32_0 = arith.constant 0 : i32
    return %arg0, %arg1, %c0_i32 : i32, i32, i32
  }
  func.func @transform_1(%arg0: i32, %arg1: i32) -> (i32, i32, i32) {
    %c0_i32 = arith.constant 0 : i32
    %c0_i32_0 = arith.constant 0 : i32
    %c0_i32_1 = arith.constant 0 : i32
    return %arg0, %c0_i32, %c0_i32_0 : i32, i32, i32
  }
  func.func @transform_2(%arg0: i32, %arg1: i32) -> (i32, i32, i32) {
    %c0_i32 = arith.constant 0 : i32
    %c0_i32_0 = arith.constant 0 : i32
    return %arg0, %arg1, %c0_i32 : i32, i32, i32
  }
}

module attributes {stable_mosaic.version = 11 : i64} {
  func.func @_sdpa_scores_kernel(%arg0: i32, %arg1: i32, %arg2: memref<1x8x32xf32, #tpu.memory_space<vmem>>, %arg3: memref<1x8x32xf32, #tpu.memory_space<vmem>>, %arg4: memref<1x8x8xf32, #tpu.memory_space<vmem>>) attributes {dimension_semantics = [#tpu.dimension_semantics<parallel>, #tpu.dimension_semantics<parallel>], iteration_bounds = array<i64: 2, 1>, scalar_prefetch = 0 : i64, scratch_operands = 0 : i64, tpu.core_type = #tpu.core_type<tc>, window_params = [{transform_indices = @transform_0, window_bounds = array<i64: 1, 8, 32>}, {transform_indices = @transform_1, window_bounds = array<i64: 1, 8, 32>}, {transform_indices = @transform_2, window_bounds = array<i64: 1, 8, 8>}]} {
    %c0 = arith.constant 0 : index
    %c0_0 = arith.constant 0 : index
    %c0_1 = arith.constant 0 : index
    %0 = vector.load %arg2[%c0, %c0_0, %c0_1] : memref<1x8x32xf32, #tpu.memory_space<vmem>>, vector<1x8x32xf32>
    %1 = vector.shape_cast %0 : vector<1x8x32xf32> to vector<8x32xf32>
    %cst = arith.constant 0.176776692 : f32
    %2 = vector.broadcast %cst : f32 to vector<8x32xf32>
    %3 = arith.mulf %1, %2 : vector<8x32xf32>
    %c0_2 = arith.constant 0 : index
    %c0_3 = arith.constant 0 : index
    %c0_4 = arith.constant 0 : index
    %4 = vector.load %arg3[%c0_2, %c0_3, %c0_4] : memref<1x8x32xf32, #tpu.memory_space<vmem>>, vector<1x8x32xf32>
    %5 = vector.shape_cast %4 : vector<1x8x32xf32> to vector<8x32xf32>
    %cst_5 = arith.constant dense<0.000000e+00> : vector<8x8xf32>
    %6 = tpu.matmul %3, %5, %cst_5 {dimension_numbers = #tpu.dot_dimension_numbers<[1], [1], [0], [0], [0, 0, 1, 0], [], []>} : vector<8x32xf32>, vector<8x32xf32>, vector<8x8xf32> -> vector<8x8xf32>
    %cst_6 = arith.constant dense<0xFF800000> : vector<8xf32>
    %7 = vector.multi_reduction <maximumf>, %6, %cst_6 [1] : vector<8x8xf32> to vector<8xf32>
    %8 = vector.shape_cast %7 : vector<8xf32> to vector<8x1xf32>
    %9 = vector.broadcast %8 : vector<8x1xf32> to vector<8x8xf32>
    %10 = arith.subf %6, %9 : vector<8x8xf32>
    %11 = math.exp %10 : vector<8x8xf32>
    %cst_7 = arith.constant dense<0.000000e+00> : vector<8xf32>
    %12 = vector.multi_reduction <add>, %11, %cst_7 [1] : vector<8x8xf32> to vector<8xf32>
    %13 = vector.shape_cast %12 : vector<8xf32> to vector<8x1xf32>
    %14 = tpu.reciprocal %13 : vector<8x1xf32> -> vector<8x1xf32>
    %15 = vector.broadcast %14 : vector<8x1xf32> to vector<8x8xf32>
    %16 = arith.mulf %11, %15 : vector<8x8xf32>
    %c0_8 = arith.constant 0 : index
    %c0_9 = arith.constant 0 : index
    %c0_10 = arith.constant 0 : index
    %17 = vector.load %arg4[%c0_8, %c0_9, %c0_10] : memref<1x8x8xf32, #tpu.memory_space<vmem>>, vector<1x8x8xf32>
    %18 = vector.shape_cast %17 : vector<1x8x8xf32> to vector<8x8xf32>
    %19 = vector.shape_cast %16 : vector<8x8xf32> to vector<1x8x8xf32>
    tpu.vector_store %arg4[%c0_8, %c0_9, %c0_10], %19 {strides = array<i32>} : memref<1x8x8xf32, #tpu.memory_space<vmem>>, vector<1x8x8xf32>,
    return
  }
  func.func @transform_0(%arg0: i32, %arg1: i32) -> (i32, i32, i32) {
    %c0_i32 = arith.constant 0 : i32
    %c0_i32_0 = arith.constant 0 : i32
    return %arg0, %arg1, %c0_i32 : i32, i32, i32
  }
  func.func @transform_1(%arg0: i32, %arg1: i32) -> (i32, i32, i32) {
    %c0_i32 = arith.constant 0 : i32
    %c0_i32_0 = arith.constant 0 : i32
    %c0_i32_1 = arith.constant 0 : i32
    return %arg0, %c0_i32, %c0_i32_0 : i32, i32, i32
  }
  func.func @transform_2(%arg0: i32, %arg1: i32) -> (i32, i32, i32) {
    %c0_i32 = arith.constant 0 : i32
    %c0_i32_0 = arith.constant 0 : i32
    return %arg0, %arg1, %c0_i32 : i32, i32, i32
  }
}

</mosaic_0001>

<llo_original>
// kernel: tpu_custom_call.1
$region0: #{tpu_custom_call.1}
  #allocation0 [shape = 'u32[]', space=smem, size = 0x4, offset = 0x4, fixed_abs, tag = 'smem constant byte address 0x4 - core index']
  #allocation1 [shape = 'u32[144,128]{1,0:T(1,128)}', space=vmem, size = 0x12000, scoped, tag = 'internal scratch']
  %s0 = inlined_call_operand.hbm [shape: f32[2,8,32], index: 0, kind: input, shape index: {}]
  %s1 = inlined_call_operand.hbm [shape: f32[2,8,32], index: 1, kind: input, shape index: {}]
  %s2 = inlined_call_operand.hbm [shape: f32[2,8,8], index: 2, kind: output, shape index: {}]
  %s3 = sld [smem:[#allocation0]]
  $region49: #{tpu_custom_call.1} parent=0
    _
  %s5 = ssub.s32 1, %s3
  %s6 = scalar_select 0, %s5, %s3
  $region1: #{tpu_custom_call.1} parent=0
    #allocation2 [shape = 'u8[8192]{0}', space=vmem, size = 0x2000, scoped, tag = 'input window, operand 0']
    #allocation3 [shape = 's32[2]{0}', space=sflag, size = 0x8, scoped, tag = 'scoped memory for tpu_custom_call.1']
    #allocation4 [shape = 's32[2]{0}', space=sflag, size = 0x8, scoped, tag = 'scoped memory for tpu_custom_call.1']
    #allocation5 [shape = 'u8[4096]{0}', space=vmem, size = 0x1000, scoped, tag = 'input window, operand 1, single buffered']
    #allocation6 [shape = 's32[1]{0}', space=sflag, size = 0x4, scoped, tag = 'scoped memory for tpu_custom_call.1']
    #allocation7 [shape = 'u8[8192]{0}', space=vmem, size = 0x2000, scoped, tag = 'output window, operand 0']
    %7 = vsyncpa [#allocation3], 0
    %s8 = scalar_lea.sflag [#allocation3], 1
    %9 = vsyncpa %s8, 0
    %10 = vsyncpa [#allocation6], 0
    %11 = vsyncpa [#allocation4], 0
    %s12 = scalar_lea.sflag [#allocation4], 1
    %13 = vsyncpa %s12, 0
    loop: start=0, step=1, limit=4
    $region2: #{tpu_custom_call.1} parent=1 // loop_pre_header
      _
    $region3: #{tpu_custom_call.1} parent=1 // loop_header
      %s15 = sphi 0, %s19
      %p16 = scmp.ge.s32.totalorder %s15, 4
      %s22 = sphi 0, %s34
      %s23 = sphi 0, %s30
      %s24 = sphi 0, %s22
      %s25 = sphi 0, %s23
      %s26 = sphi 0, %s24
      %s27 = sphi 0, %s25
      %s39 = sphi 0, %s41
      %s42 = sphi 0, %s39
      %s43 = sphi 0, %s42
      %s59 = sphi 0, %s43
      %s65 = sphi 0, %s67
      %s68 = sphi 0, %s65
      %s69 = sphi 0, %s68
      %s85 = sphi 0, %s69
      %s93 = sphi 0, %s95
      %s96 = sphi 0, %s93
      %s97 = sphi 0, %s96
      %s113 = sphi 0, %s97
    $region4: #{tpu_custom_call.1} parent=1 // loop_header_branch
      %18 = sbr.rel (%p16) target = $region8
    $region5: #{tpu_custom_call.1} parent=1 // loop_body
      %s20 = ssub.s32 %s15, 1
      %s21 = ssub.s32 %s15, 2
      %s28 = sadd.s32 1, %s23
      %p29 = scmp.ge.s32.totalorder %s28, 1
      %s30 = scalar_select %p29, 0, %s28
      %s31 = sadd.s32 1, %s22
      %s32 = scalar_select %p29, %s31, %s22
      %p33 = scmp.ge.s32.totalorder %s32, 2
      %s34 = scalar_select %p33, 0, %s32
      %s35 = ssub.s32 %s22, %s34
      %s36 = ssub.s32 %s23, %s30
      %s37 = sor.u32 %s35, %s36
      %p38 = scmp.eq.s32.totalorder %s37, 0
      %s40 = sadd.s32 %s39, 1
      %s41 = scalar_select %p38, %s39, %s40
      %p44 = pneg %p38
      %p45 = scmp.eq.s32.totalorder %s15, 1
      %p46 = por %p44, %p45
      %p47 = scmp.ne.s32.totalorder %s39, %s42
      %p48 = scmp.eq.s32.totalorder %s15, 0
      %p49 = por %p47, %p48
      %p50 = scmp.ne.s32.totalorder %s39, %s42
      %p51 = scmp.eq.s32.totalorder %s20, 1
      %p52 = por %p50, %p51
      %p53 = scmp.ne.s32.totalorder %s42, %s43
      %p54 = scmp.eq.s32.totalorder %s20, 0
      %p55 = por %p53, %p54
      %p56 = scmp.ne.s32.totalorder %s42, %s43
      %p57 = scmp.eq.s32.totalorder %s21, 1
      %p58 = por %p56, %p57
      %p60 = scmp.ne.s32.totalorder %s43, %s59
      %p61 = scmp.eq.s32.totalorder %s21, 0
      %p62 = por %p60, %p61
      %s63 = ssub.s32 %s22, %s34
      %p64 = scmp.eq.s32.totalorder %s63, 0
      %s66 = sadd.s32 %s65, 1
      %s67 = scalar_select %p64, %s65, %s66
      %p70 = pneg %p64
      %p71 = scmp.eq.s32.totalorder %s15, 1
      %p72 = por %p70, %p71
      %p73 = scmp.ne.s32.totalorder %s65, %s68
      %p74 = scmp.eq.s32.totalorder %s15, 0
      %p75 = por %p73, %p74
      %p76 = scmp.ne.s32.totalorder %s65, %s68
      %p77 = scmp.eq.s32.totalorder %s20, 1
      %p78 = por %p76, %p77
      %p79 = scmp.ne.s32.totalorder %s68, %s69
      %p80 = scmp.eq.s32.totalorder %s20, 0
      %p81 = por %p79, %p80
      %p82 = scmp.ne.s32.totalorder %s68, %s69
      %p83 = scmp.eq.s32.totalorder %s21, 1
      %p84 = por %p82, %p83
      %p86 = scmp.ne.s32.totalorder %s69, %s85
      %p87 = scmp.eq.s32.totalorder %s21, 0
      %p88 = por %p86, %p87
      %s89 = ssub.s32 %s22, %s34
      %s90 = ssub.s32 %s23, %s30
      %s91 = sor.u32 %s89, %s90
      %p92 = scmp.eq.s32.totalorder %s91, 0
      %s94 = sadd.s32 %s93, 1
      %s95 = scalar_select %p92, %s93, %s94
      %p98 = pneg %p92
      %p99 = scmp.eq.s32.totalorder %s15, 1
      %p100 = por %p98, %p99
      %p101 = scmp.ne.s32.totalorder %s93, %s96
      %p102 = scmp.eq.s32.totalorder %s15, 0
      %p103 = por %p101, %p102
      %p104 = scmp.ne.s32.totalorder %s93, %s96
      %p105 = scmp.eq.s32.totalorder %s20, 1
      %p106 = por %p104, %p105
      %p107 = scmp.ne.s32.totalorder %s96, %s97
      %p108 = scmp.eq.s32.totalorder %s20, 0
      %p109 = por %p107, %p108
      %p110 = scmp.ne.s32.totalorder %s96, %s97
      %p111 = scmp.eq.s32.totalorder %s21, 1
      %p112 = por %p110, %p111
      %p114 = scmp.ne.s32.totalorder %s97, %s113
      %p115 = scmp.eq.s32.totalorder %s21, 0
      %p116 = por %p114, %p115
      %p117 = scmp.le.s32.totalorder 1, %s15
      %p118 = scmp.lt.s32.totalorder %s15, 3
      %p119 = pnand %p117, %p118
      %p120 = pneg %p119
      // Predicated region
      $region9: #{tpu_custom_call.1} parent=5 // pred_check
        _
      $region10: #{tpu_custom_call.1} parent=5 // pred_check_branch
        %122 = sbr.rel (%p119) target = $region12
      $region11: #{tpu_custom_call.1} parent=5 // pred_region
        %s123 = ssub.s32 %s15, 1
        // Predicated region
        $region13: #{tpu_custom_call.1} parent=11 // pred_check
          %p124 = pneg %p81
        $region14: #{tpu_custom_call.1} parent=11 // pred_check_branch
          %126 = sbr.rel (%p124) target = $region16
        $region15: #{tpu_custom_call.1} parent=11 // pred_region
          %s128 = ssub.s32 128, 128
          %129 = vsyncadd [#allocation6], %s128
          %s130 = smul.addr %s24, 128
          %s131 = scalar_lea.hbm %s1, %s130
          %s133 = sshll.u32 [#allocation5], 4
          %s134 = int_to_ptr.vmem [resolvable:$true] %s133
          %136 = dma.hbm_to_vmem [thread:$0]  %s131, 128, %s134, [#allocation6]
        $region16: #{tpu_custom_call.1} parent=11 // pred_fallthru
          _
      $region12: #{tpu_custom_call.1} parent=5 // pred_fallthru
        _
      %p137 = scmp.lt.s32.totalorder %s15, 2
      // Predicated region
      $region17: #{tpu_custom_call.1} parent=5 // pred_check
        %p138 = pneg %p137
      $region18: #{tpu_custom_call.1} parent=5 // pred_check_branch
        %140 = sbr.rel (%p138) target = $region20
      $region19: #{tpu_custom_call.1} parent=5 // pred_region
        // Predicated region
        $region21: #{tpu_custom_call.1} parent=19 // pred_check
          %p141 = pneg %p49
        $region22: #{tpu_custom_call.1} parent=19 // pred_check_branch
          %143 = sbr.rel (%p141) target = $region24
        $region23: #{tpu_custom_call.1} parent=19 // pred_region
          %s144 = sand.u32 %s39, 1
          %s145 = scalar_lea.sflag [#allocation3], %s144
          %s146 = sand.u32 %s39, 1
          %s147 = smul.addr %s146, 8
          %s148 = scalar_lea.vmem [#allocation2], %s147
          %s150 = ssub.s32 128, 128
          %151 = vsyncadd %s145, %s150
          %s152 = sadd.s32 %s23, %s22
          %s153 = smul.addr %s152, 128
          %s154 = scalar_lea.hbm %s0, %s153
          %s156 = sshll.u32 %s148, 4
          %s157 = int_to_ptr.vmem [resolvable:$true] %s156
          %159 = dma.hbm_to_vmem [thread:$0]  %s154, 128, %s157, %s145
        $region24: #{tpu_custom_call.1} parent=19 // pred_fallthru
          _
      $region20: #{tpu_custom_call.1} parent=5 // pred_fallthru
        _
      %p160 = scmp.le.s32.totalorder 1, %s15
      %p161 = scmp.lt.s32.totalorder %s15, 3
      %p162 = pnand %p160, %p161
      %p163 = pneg %p162
      // Predicated region
      $region25: #{tpu_custom_call.1} parent=5 // pred_check
        _
      $region26: #{tpu_custom_call.1} parent=5 // pred_check_branch
        %165 = sbr.rel (%p162) target = $region28
      $region27: #{tpu_custom_call.1} parent=5 // pred_region
        %s166 = ssub.s32 %s15, 1
        %s167 = sand.u32 %s42, 1
        %s168 = scalar_lea.sflag [#allocation3], %s167
        %s169 = sand.u32 %s42, 1
        %s170 = smul.addr %s169, 8
        %s171 = scalar_lea.vmem [#allocation2], %s170
        // Predicated region
        $region29: #{tpu_custom_call.1} parent=27 // pred_check
          %p172 = pneg %p55
        $region30: #{tpu_custom_call.1} parent=27 // pred_check_branch
          %174 = sbr.rel (%p172) target = $region32
        $region31: #{tpu_custom_call.1} parent=27 // pred_region
          %175 = dma.done %s168, 128
        $region32: #{tpu_custom_call.1} parent=27 // pred_fallthru
          _
        // Predicated region
        $region33: #{tpu_custom_call.1} parent=27 // pred_check
          %p176 = pneg %p81
        $region34: #{tpu_custom_call.1} parent=27 // pred_check_branch
          %178 = sbr.rel (%p176) target = $region36
        $region35: #{tpu_custom_call.1} parent=27 // pred_region
          %179 = dma.done [#allocation6], 128
        $region36: #{tpu_custom_call.1} parent=27 // pred_fallthru
          _
        %s180 = sand.u32 %s42, 1
        %s181 = scalar_lea.sflag [#allocation3], %s180
        %s182 = sand.u32 %s42, 1
        %s183 = smul.addr %s182, 8
        %s184 = scalar_lea.vmem [#allocation2], %s183
        %p185 = pneg %p55
        %p186 = pneg %p52
        %p187 = pneg %p81
        %p188 = pneg %p78
        %p189 = pneg %p109
        %p190 = pneg %p106
        %s191 = sand.u32 %s96, 1
        %s192 = scalar_lea.sflag [#allocation4], %s191
        %s193 = sand.u32 %s96, 1
        %s194 = smul.addr %s193, 8
        %s195 = scalar_lea.vmem [#allocation7], %s194
        %v196 = vld [vmem:[%s171] sm:$0xff]
        %v197 = vmul.f32 %v196, 0.17677669
        %v198 = vld [vmem:[#allocation5] sm:$0xff]
        %vm199 = vcmask 261120
        %v201 = vsel %vm199, %v197, 0
        %v204 = vsel %vm199, %v198, 0
        %206 = vmatprep.subr.mxu0 0.0
        %207 = vmatpush1.xpose.msra.mxu0 %v204
        %208 = vmatprep.subr.mxu0 0.0
        %209 = vmatpush1.xpose.msra.mxu0 0.0
        %210 = vmatprep.subr.mxu0 0.0
        %211 = vmatpush1.xpose.msra.mxu0 0.0
        %212 = vmatprep.subr.mxu0 0.0
        %213 = vmatpush1.xpose.msra.mxu0 0.0
        %214 = vmatprep.subr.mxu0 0.0
        %215 = vmatpush1.xpose.msra.mxu0 0.0
        %216 = vmatprep.subr.mxu0 0.0
        %217 = vmatpush1.xpose.msra.mxu0 0.0
        %218 = vmatprep.subr.mxu0 0.0
        %219 = vmatpush1.xpose.msra.mxu0 0.0
        %220 = vmatprep.subr.mxu0 0.0
        %221 = vmatpush1.xpose.msra.mxu0 0.0
        %222 = vmatprep.subr.mxu0 0.0
        %223 = vmatpush1.xpose.msra.mxu0 0.0
        %224 = vmatprep.subr.mxu0 0.0
        %225 = vmatpush1.xpose.msra.mxu0 0.0
        %226 = vmatprep.subr.mxu0 0.0
        %227 = vmatpush1.xpose.msra.mxu0 0.0
        %228 = vmatprep.subr.mxu0 0.0
        %229 = vmatpush1.xpose.msra.mxu0 0.0
        %230 = vmatprep.subr.mxu0 0.0
        %231 = vmatpush1.xpose.msra.mxu0 0.0
        %232 = vmatprep.subr.mxu0 0.0
        %233 = vmatpush1.xpose.msra.mxu0 0.0
        %234 = vmatprep.subr.mxu0 0.0
        %235 = vmatpush1.xpose.msra.mxu0 0.0
        %236 = vmatprep.subr.mxu0 0.0
        %237 = vmatpush1.xpose.msra.mxu0 0.0
        %238 = vmatprep.subr.mxu0 0.0
        %239 = vmatpush1.xpose.msra.mxu0 0.0
        %240 = vmatprep.subr.mxu0 0.0
        %241 = vmatpush1.xpose.msra.mxu0 0.0
        %242 = vmatprep.subr.mxu0 0.0
        %243 = vmatpush1.xpose.msra.mxu0 0.0
        %244 = vmatprep.subr.mxu0 0.0
        %245 = vmatpush1.xpose.msra.mxu0 0.0
        %246 = vmatprep.subr.mxu0 0.0
        %247 = vmatpush1.xpose.msra.mxu0 0.0
        %248 = vmatprep.subr.mxu0 0.0
        %249 = vmatpush1.xpose.msra.mxu0 0.0
        %250 = vmatprep.subr.mxu0 0.0
        %251 = vmatpush1.xpose.msra.mxu0 0.0
        %252 = vmatprep.subr.mxu0 0.0
        %253 = vmatpush1.xpose.msra.mxu0 0.0
        %254 = vmatprep.subr.mxu0 0.0
        %255 = vmatpush1.xpose.msra.mxu0 0.0
        %256 = vmatprep.subr.mxu0 0.0
        %257 = vmatpush1.xpose.msra.mxu0 0.0
        %258 = vmatprep.subr.mxu0 0.0
        %259 = vmatpush1.xpose.msra.mxu0 0.0
        %260 = vmatprep.subr.mxu0 0.0
        %261 = vmatpush1.xpose.msra.mxu0 0.0
        %262 = vmatprep.subr.mxu0 0.0
        %263 = vmatpush1.xpose.msra.mxu0 0.0
        %264 = vmatprep.subr.mxu0 0.0
        %265 = vmatpush1.xpose.msra.mxu0 0.0
        %266 = vmatprep.subr.mxu0 0.0
        %267 = vmatpush1.xpose.msra.mxu0 0.0
        %268 = vmatprep.subr.mxu0 0.0
        %269 = vmatpush1.xpose.msra.mxu0 0.0
        %270 = vmatprep.mubr.f32.mxu0 0.0
        %271 = vmatmul.mubr.f32.gmra.mrb[0].mxu0 %v201
        %v272 = vpop.f32.mrb[0].mxu0
        %v273 = vadd.f32 0.0, %v272
        %v274 = vpop.f32.mrb[0].mxu0
        %275 = vdwg.mxu0
        %vm276 = vcmask 64512
        %v277 = vsel %vm276, %v273, -inf
        %278 = vmax.xlane.f32.xlu0 %v277
        %v279 = vpop.xlane.xlu0 %278
        %v280 = vsub.f32 %v273, %v279
        %v281 = vmul.f32 %v280, 1.442695
        %v282 = vpow.pop %v281
        %v283 = vsel %vm276, %v282, 0.0
        %284 = vadd.xlane.f32.xlu0 %v283
        %v285 = vpop.xlane.xlu0 %284
        %v286 = vrcp.pop %v285
        %v287 = vmul.f32 %v282, %v286
        %288 = vst.msk [vmem:[%s195] sm:$0xff] %vm276, %v287
        %s289 = sand.u32 %s96, 1
        %s290 = scalar_lea.sflag [#allocation4], %s289
        %s291 = sand.u32 %s96, 1
        %s292 = smul.addr %s291, 8
        %s293 = scalar_lea.vmem [#allocation7], %s292
        // Predicated region
        $region37: #{tpu_custom_call.1} parent=27 // pred_check
          %p294 = pneg %p106
        $region38: #{tpu_custom_call.1} parent=27 // pred_check_branch
          %296 = sbr.rel (%p294) target = $region40
        $region39: #{tpu_custom_call.1} parent=27 // pred_region
          %s298 = ssub.s32 128, 128
          %299 = vsyncadd %s290, %s298
          %s300 = sadd.s32 %s25, %s24
          %s301 = smul.addr %s300, 128
          %s302 = scalar_lea.hbm %s2, %s301
          %s304 = sshll.u32 %s293, 4
          %s305 = int_to_ptr.vmem [resolvable:$true] %s304
          %307 = dma.vmem_to_hbm [thread:$0]  %s305, 128, %s302, %s290
        $region40: #{tpu_custom_call.1} parent=27 // pred_fallthru
          _
      $region28: #{tpu_custom_call.1} parent=5 // pred_fallthru
        _
      %p308 = scmp.le.s32.totalorder 2, %s15
      // Predicated region
      $region41: #{tpu_custom_call.1} parent=5 // pred_check
        %p309 = pneg %p308
      $region42: #{tpu_custom_call.1} parent=5 // pred_check_branch
        %311 = sbr.rel (%p309) target = $region44
      $region43: #{tpu_custom_call.1} parent=5 // pred_region
        %s312 = ssub.s32 %s15, 2
        // Predicated region
        $region45: #{tpu_custom_call.1} parent=43 // pred_check
          %p313 = pneg %p112
        $region46: #{tpu_custom_call.1} parent=43 // pred_check_branch
          %315 = sbr.rel (%p313) target = $region48
        $region47: #{tpu_custom_call.1} parent=43 // pred_region
          %s316 = sand.u32 %s97, 1
          %s317 = scalar_lea.sflag [#allocation4], %s316
          %s318 = sand.u32 %s97, 1
          %s319 = smul.addr %s318, 8
          %s320 = scalar_lea.vmem [#allocation7], %s319
          %321 = dma.done %s317, 128
        $region48: #{tpu_custom_call.1} parent=43 // pred_fallthru
          _
      $region44: #{tpu_custom_call.1} parent=5 // pred_fallthru
        _
    $region6: #{tpu_custom_call.1} parent=1 // loop_footer
      %s19 = sadd.s32 1, %s15
    $region7: #{tpu_custom_call.1} parent=1 // loop_footer_branch
      %14 = sbr.rel target = $region3
    $region8: #{tpu_custom_call.1} parent=1 // loop_exit
      _
    %322 = vsyncpa [#allocation3], 1
    %s323 = scalar_lea.sflag [#allocation3], 1
    %324 = vsyncpa %s323, 1
    %325 = vsyncpa [#allocation6], 1
    %326 = vsyncpa [#allocation4], 1
    %s327 = scalar_lea.sflag [#allocation4], 1
    %328 = vsyncpa %s327, 1

// kernel: tpu_custom_call.1
$region0: #{tpu_custom_call.1}
  #allocation0 [shape = 'u32[]', space=smem, size = 0x4, offset = 0x4, fixed_abs, tag = 'smem constant byte address 0x4 - core index']
  #allocation1 [shape = 'u32[144,128]{1,0:T(1,128)}', space=vmem, size = 0x12000, scoped, tag = 'internal scratch']
  %s0 = inlined_call_operand.hbm [shape: f32[2,8,32], index: 0, kind: input, shape index: {}]
  %s1 = inlined_call_operand.hbm [shape: f32[2,8,32], index: 1, kind: input, shape index: {}]
  %s2 = inlined_call_operand.hbm [shape: f32[2,8,8], index: 2, kind: output, shape index: {}]
  %s3 = sld [smem:[#allocation0]]
  $region49: #{tpu_custom_call.1} parent=0
    _
  %s5 = ssub.s32 1, %s3
  %s6 = scalar_select 0, %s5, %s3
  $region1: #{tpu_custom_call.1} parent=0
    #allocation2 [shape = 'u8[8192]{0}', space=vmem, size = 0x2000, scoped, tag = 'input window, operand 0']
    #allocation3 [shape = 's32[2]{0}', space=sflag, size = 0x8, scoped, tag = 'scoped memory for tpu_custom_call.1']
    #allocation4 [shape = 's32[2]{0}', space=sflag, size = 0x8, scoped, tag = 'scoped memory for tpu_custom_call.1']
    #allocation5 [shape = 'u8[8192]{0}', space=vmem, size = 0x2000, scoped, tag = 'input window, operand 1']
    #allocation6 [shape = 's32[2]{0}', space=sflag, size = 0x8, scoped, tag = 'scoped memory for tpu_custom_call.1']
    #allocation7 [shape = 'u8[8192]{0}', space=vmem, size = 0x2000, scoped, tag = 'output window, operand 0']
    %7 = vsyncpa [#allocation3], 0
    %s8 = scalar_lea.sflag [#allocation3], 1
    %9 = vsyncpa %s8, 0
    %10 = vsyncpa [#allocation6], 0
    %s11 = scalar_lea.sflag [#allocation6], 1
    %12 = vsyncpa %s11, 0
    %13 = vsyncpa [#allocation4], 0
    %s14 = scalar_lea.sflag [#allocation4], 1
    %15 = vsyncpa %s14, 0
    loop: start=0, step=1, limit=4
    $region2: #{tpu_custom_call.1} parent=1 // loop_pre_header
      _
    $region3: #{tpu_custom_call.1} parent=1 // loop_header
      %s17 = sphi 0, %s21
      %p18 = scmp.ge.s32.totalorder %s17, 4
      %s24 = sphi 0, %s36
      %s25 = sphi 0, %s32
      %s26 = sphi 0, %s24
      %s27 = sphi 0, %s25
      %s28 = sphi 0, %s26
      %s29 = sphi 0, %s27
      %s41 = sphi 0, %s43
      %s44 = sphi 0, %s41
      %s45 = sphi 0, %s44
      %s61 = sphi 0, %s45
      %s67 = sphi 0, %s69
      %s70 = sphi 0, %s67
      %s71 = sphi 0, %s70
      %s87 = sphi 0, %s71
      %s95 = sphi 0, %s97
      %s98 = sphi 0, %s95
      %s99 = sphi 0, %s98
      %s115 = sphi 0, %s99
    $region4: #{tpu_custom_call.1} parent=1 // loop_header_branch
      %20 = sbr.rel (%p18) target = $region8
    $region5: #{tpu_custom_call.1} parent=1 // loop_body
      %s22 = ssub.s32 %s17, 1
      %s23 = ssub.s32 %s17, 2
      %s30 = sadd.s32 1, %s25
      %p31 = scmp.ge.s32.totalorder %s30, 1
      %s32 = scalar_select %p31, 0, %s30
      %s33 = sadd.s32 1, %s24
      %s34 = scalar_select %p31, %s33, %s24
      %p35 = scmp.ge.s32.totalorder %s34, 2
      %s36 = scalar_select %p35, 0, %s34
      %s37 = ssub.s32 %s24, %s36
      %s38 = ssub.s32 %s25, %s32
      %s39 = sor.u32 %s37, %s38
      %p40 = scmp.eq.s32.totalorder %s39, 0
      %s42 = sadd.s32 %s41, 1
      %s43 = scalar_select %p40, %s41, %s42
      %p46 = pneg %p40
      %p47 = scmp.eq.s32.totalorder %s17, 1
      %p48 = por %p46, %p47
      %p49 = scmp.ne.s32.totalorder %s41, %s44
      %p50 = scmp.eq.s32.totalorder %s17, 0
      %p51 = por %p49, %p50
      %p52 = scmp.ne.s32.totalorder %s41, %s44
      %p53 = scmp.eq.s32.totalorder %s22, 1
      %p54 = por %p52, %p53
      %p55 = scmp.ne.s32.totalorder %s44, %s45
      %p56 = scmp.eq.s32.totalorder %s22, 0
      %p57 = por %p55, %p56
      %p58 = scmp.ne.s32.totalorder %s44, %s45
      %p59 = scmp.eq.s32.totalorder %s23, 1
      %p60 = por %p58, %p59
      %p62 = scmp.ne.s32.totalorder %s45, %s61
      %p63 = scmp.eq.s32.totalorder %s23, 0
      %p64 = por %p62, %p63
      %s65 = ssub.s32 %s24, %s36
      %p66 = scmp.eq.s32.totalorder %s65, 0
      %s68 = sadd.s32 %s67, 1
      %s69 = scalar_select %p66, %s67, %s68
      %p72 = pneg %p66
      %p73 = scmp.eq.s32.totalorder %s17, 1
      %p74 = por %p72, %p73
      %p75 = scmp.ne.s32.totalorder %s67, %s70
      %p76 = scmp.eq.s32.totalorder %s17, 0
      %p77 = por %p75, %p76
      %p78 = scmp.ne.s32.totalorder %s67, %s70
      %p79 = scmp.eq.s32.totalorder %s22, 1
      %p80 = por %p78, %p79
      %p81 = scmp.ne.s32.totalorder %s70, %s71
      %p82 = scmp.eq.s32.totalorder %s22, 0
      %p83 = por %p81, %p82
      %p84 = scmp.ne.s32.totalorder %s70, %s71
      %p85 = scmp.eq.s32.totalorder %s23, 1
      %p86 = por %p84, %p85
      %p88 = scmp.ne.s32.totalorder %s71, %s87
      %p89 = scmp.eq.s32.totalorder %s23, 0
      %p90 = por %p88, %p89
      %s91 = ssub.s32 %s24, %s36
      %s92 = ssub.s32 %s25, %s32
      %s93 = sor.u32 %s91, %s92
      %p94 = scmp.eq.s32.totalorder %s93, 0
      %s96 = sadd.s32 %s95, 1
      %s97 = scalar_select %p94, %s95, %s96
      %p100 = pneg %p94
      %p101 = scmp.eq.s32.totalorder %s17, 1
      %p102 = por %p100, %p101
      %p103 = scmp.ne.s32.totalorder %s95, %s98
      %p104 = scmp.eq.s32.totalorder %s17, 0
      %p105 = por %p103, %p104
      %p106 = scmp.ne.s32.totalorder %s95, %s98
      %p107 = scmp.eq.s32.totalorder %s22, 1
      %p108 = por %p106, %p107
      %p109 = scmp.ne.s32.totalorder %s98, %s99
      %p110 = scmp.eq.s32.totalorder %s22, 0
      %p111 = por %p109, %p110
      %p112 = scmp.ne.s32.totalorder %s98, %s99
      %p113 = scmp.eq.s32.totalorder %s23, 1
      %p114 = por %p112, %p113
      %p116 = scmp.ne.s32.totalorder %s99, %s115
      %p117 = scmp.eq.s32.totalorder %s23, 0
      %p118 = por %p116, %p117
      %p119 = scmp.le.s32.totalorder 1, %s17
      %p120 = scmp.lt.s32.totalorder %s17, 3
      %p121 = pnand %p119, %p120
      %p122 = pneg %p121
      // Predicated region
      $region9: #{tpu_custom_call.1} parent=5 // pred_check
        _
      $region10: #{tpu_custom_call.1} parent=5 // pred_check_branch
        %124 = sbr.rel (%p121) target = $region12
      $region11: #{tpu_custom_call.1} parent=5 // pred_region
        %s125 = ssub.s32 %s17, 1
      $region12: #{tpu_custom_call.1} parent=5 // pred_fallthru
        _
      %p126 = scmp.lt.s32.totalorder %s17, 2
      // Predicated region
      $region13: #{tpu_custom_call.1} parent=5 // pred_check
        %p127 = pneg %p126
      $region14: #{tpu_custom_call.1} parent=5 // pred_check_branch
        %129 = sbr.rel (%p127) target = $region16
      $region15: #{tpu_custom_call.1} parent=5 // pred_region
        // Predicated region
        $region17: #{tpu_custom_call.1} parent=15 // pred_check
          %p130 = pneg %p51
        $region18: #{tpu_custom_call.1} parent=15 // pred_check_branch
          %132 = sbr.rel (%p130) target = $region20
        $region19: #{tpu_custom_call.1} parent=15 // pred_region
          %s133 = sand.u32 %s41, 1
          %s134 = scalar_lea.sflag [#allocation3], %s133
          %s135 = sand.u32 %s41, 1
          %s136 = smul.addr %s135, 8
          %s137 = scalar_lea.vmem [#allocation2], %s136
          %s139 = ssub.s32 128, 128
          %140 = vsyncadd %s134, %s139
          %s141 = sadd.s32 %s25, %s24
          %s142 = smul.addr %s141, 128
          %s143 = scalar_lea.hbm %s0, %s142
          %s145 = sshll.u32 %s137, 4
          %s146 = int_to_ptr.vmem [resolvable:$true] %s145
          %148 = dma.hbm_to_vmem [thread:$0]  %s143, 128, %s146, %s134
        $region20: #{tpu_custom_call.1} parent=15 // pred_fallthru
          _
        // Predicated region
        $region21: #{tpu_custom_call.1} parent=15 // pred_check
          %p149 = pneg %p77
        $region22: #{tpu_custom_call.1} parent=15 // pred_check_branch
          %151 = sbr.rel (%p149) target = $region24
        $region23: #{tpu_custom_call.1} parent=15 // pred_region
          %s152 = sand.u32 %s67, 1
          %s153 = scalar_lea.sflag [#allocation6], %s152
          %s154 = sand.u32 %s67, 1
          %s155 = smul.addr %s154, 8
          %s156 = scalar_lea.vmem [#allocation5], %s155
          %s158 = ssub.s32 128, 128
          %159 = vsyncadd %s153, %s158
          %s160 = smul.addr %s24, 128
          %s161 = scalar_lea.hbm %s1, %s160
          %s163 = sshll.u32 %s156, 4
          %s164 = int_to_ptr.vmem [resolvable:$true] %s163
          %166 = dma.hbm_to_vmem [thread:$0]  %s161, 128, %s164, %s153
        $region24: #{tpu_custom_call.1} parent=15 // pred_fallthru
          _
      $region16: #{tpu_custom_call.1} parent=5 // pred_fallthru
        _
      %p167 = scmp.le.s32.totalorder 1, %s17
      %p168 = scmp.lt.s32.totalorder %s17, 3
      %p169 = pnand %p167, %p168
      %p170 = pneg %p169
      // Predicated region
      $region25: #{tpu_custom_call.1} parent=5 // pred_check
        _
      $region26: #{tpu_custom_call.1} parent=5 // pred_check_branch
        %172 = sbr.rel (%p169) target = $region28
      $region27: #{tpu_custom_call.1} parent=5 // pred_region
        %s173 = ssub.s32 %s17, 1
        %s174 = sand.u32 %s44, 1
        %s175 = scalar_lea.sflag [#allocation3], %s174
        %s176 = sand.u32 %s44, 1
        %s177 = smul.addr %s176, 8
        %s178 = scalar_lea.vmem [#allocation2], %s177
        // Predicated region
        $region29: #{tpu_custom_call.1} parent=27 // pred_check
          %p179 = pneg %p57
        $region30: #{tpu_custom_call.1} parent=27 // pred_check_branch
          %181 = sbr.rel (%p179) target = $region32
        $region31: #{tpu_custom_call.1} parent=27 // pred_region
          %182 = dma.done %s175, 128
        $region32: #{tpu_custom_call.1} parent=27 // pred_fallthru
          _
        %s183 = sand.u32 %s70, 1
        %s184 = scalar_lea.sflag [#allocation6], %s183
        %s185 = sand.u32 %s70, 1
        %s186 = smul.addr %s185, 8
        %s187 = scalar_lea.vmem [#allocation5], %s186
        // Predicated region
        $region33: #{tpu_custom_call.1} parent=27 // pred_check
          %p188 = pneg %p83
        $region34: #{tpu_custom_call.1} parent=27 // pred_check_branch
          %190 = sbr.rel (%p188) target = $region36
        $region35: #{tpu_custom_call.1} parent=27 // pred_region
          %191 = dma.done %s184, 128
        $region36: #{tpu_custom_call.1} parent=27 // pred_fallthru
          _
        %s192 = sand.u32 %s44, 1
        %s193 = scalar_lea.sflag [#allocation3], %s192
        %s194 = sand.u32 %s44, 1
        %s195 = smul.addr %s194, 8
        %s196 = scalar_lea.vmem [#allocation2], %s195
        %p197 = pneg %p57
        %p198 = pneg %p54
        %s199 = sand.u32 %s70, 1
        %s200 = scalar_lea.sflag [#allocation6], %s199
        %s201 = sand.u32 %s70, 1
        %s202 = smul.addr %s201, 8
        %s203 = scalar_lea.vmem [#allocation5], %s202
        %p204 = pneg %p83
        %p205 = pneg %p80
        %p206 = pneg %p111
        %p207 = pneg %p108
        %s208 = sand.u32 %s98, 1
        %s209 = scalar_lea.sflag [#allocation4], %s208
        %s210 = sand.u32 %s98, 1
        %s211 = smul.addr %s210, 8
        %s212 = scalar_lea.vmem [#allocation7], %s211
        %v213 = vld [vmem:[%s178] sm:$0xff]
        %v214 = vmul.f32 %v213, 0.17677669
        %v215 = vld [vmem:[%s187] sm:$0xff]
        %vm216 = vcmask 261120
        %v218 = vsel %vm216, %v214, 0
        %v221 = vsel %vm216, %v215, 0
        %223 = vmatprep.subr.mxu0 0.0
        %224 = vmatpush1.xpose.msra.mxu0 %v221
        %225 = vmatprep.subr.mxu0 0.0
        %226 = vmatpush1.xpose.msra.mxu0 0.0
        %227 = vmatprep.subr.mxu0 0.0
        %228 = vmatpush1.xpose.msra.mxu0 0.0
        %229 = vmatprep.subr.mxu0 0.0
        %230 = vmatpush1.xpose.msra.mxu0 0.0
        %231 = vmatprep.subr.mxu0 0.0
        %232 = vmatpush1.xpose.msra.mxu0 0.0
        %233 = vmatprep.subr.mxu0 0.0
        %234 = vmatpush1.xpose.msra.mxu0 0.0
        %235 = vmatprep.subr.mxu0 0.0
        %236 = vmatpush1.xpose.msra.mxu0 0.0
        %237 = vmatprep.subr.mxu0 0.0
        %238 = vmatpush1.xpose.msra.mxu0 0.0
        %239 = vmatprep.subr.mxu0 0.0
        %240 = vmatpush1.xpose.msra.mxu0 0.0
        %241 = vmatprep.subr.mxu0 0.0
        %242 = vmatpush1.xpose.msra.mxu0 0.0
        %243 = vmatprep.subr.mxu0 0.0
        %244 = vmatpush1.xpose.msra.mxu0 0.0
        %245 = vmatprep.subr.mxu0 0.0
        %246 = vmatpush1.xpose.msra.mxu0 0.0
        %247 = vmatprep.subr.mxu0 0.0
        %248 = vmatpush1.xpose.msra.mxu0 0.0
        %249 = vmatprep.subr.mxu0 0.0
        %250 = vmatpush1.xpose.msra.mxu0 0.0
        %251 = vmatprep.subr.mxu0 0.0
        %252 = vmatpush1.xpose.msra.mxu0 0.0
        %253 = vmatprep.subr.mxu0 0.0
        %254 = vmatpush1.xpose.msra.mxu0 0.0
        %255 = vmatprep.subr.mxu0 0.0
        %256 = vmatpush1.xpose.msra.mxu0 0.0
        %257 = vmatprep.subr.mxu0 0.0
        %258 = vmatpush1.xpose.msra.mxu0 0.0
        %259 = vmatprep.subr.mxu0 0.0
        %260 = vmatpush1.xpose.msra.mxu0 0.0
        %261 = vmatprep.subr.mxu0 0.0
        %262 = vmatpush1.xpose.msra.mxu0 0.0
        %263 = vmatprep.subr.mxu0 0.0
        %264 = vmatpush1.xpose.msra.mxu0 0.0
        %265 = vmatprep.subr.mxu0 0.0
        %266 = vmatpush1.xpose.msra.mxu0 0.0
        %267 = vmatprep.subr.mxu0 0.0
        %268 = vmatpush1.xpose.msra.mxu0 0.0
        %269 = vmatprep.subr.mxu0 0.0
        %270 = vmatpush1.xpose.msra.mxu0 0.0
        %271 = vmatprep.subr.mxu0 0.0
        %272 = vmatpush1.xpose.msra.mxu0 0.0
        %273 = vmatprep.subr.mxu0 0.0
        %274 = vmatpush1.xpose.msra.mxu0 0.0
        %275 = vmatprep.subr.mxu0 0.0
        %276 = vmatpush1.xpose.msra.mxu0 0.0
        %277 = vmatprep.subr.mxu0 0.0
        %278 = vmatpush1.xpose.msra.mxu0 0.0
        %279 = vmatprep.subr.mxu0 0.0
        %280 = vmatpush1.xpose.msra.mxu0 0.0
        %281 = vmatprep.subr.mxu0 0.0
        %282 = vmatpush1.xpose.msra.mxu0 0.0
        %283 = vmatprep.subr.mxu0 0.0
        %284 = vmatpush1.xpose.msra.mxu0 0.0
        %285 = vmatprep.subr.mxu0 0.0
        %286 = vmatpush1.xpose.msra.mxu0 0.0
        %287 = vmatprep.mubr.f32.mxu0 0.0
        %288 = vmatmul.mubr.f32.gmra.mrb[0].mxu0 %v218
        %v289 = vpop.f32.mrb[0].mxu0
        %v290 = vadd.f32 0.0, %v289
        %v291 = vpop.f32.mrb[0].mxu0
        %292 = vdwg.mxu0
        %vm293 = vcmask 64512
        %v294 = vsel %vm293, %v290, -inf
        %295 = vmax.xlane.f32.xlu0 %v294
        %v296 = vpop.xlane.xlu0 %295
        %v297 = vsub.f32 %v290, %v296
        %v298 = vmul.f32 %v297, 1.442695
        %v299 = vpow.pop %v298
        %v300 = vsel %vm293, %v299, 0.0
        %301 = vadd.xlane.f32.xlu0 %v300
        %v302 = vpop.xlane.xlu0 %301
        %v303 = vrcp.pop %v302
        %v304 = vmul.f32 %v299, %v303
        %305 = vst.msk [vmem:[%s212] sm:$0xff] %vm293, %v304
        %s306 = sand.u32 %s98, 1
        %s307 = scalar_lea.sflag [#allocation4], %s306
        %s308 = sand.u32 %s98, 1
        %s309 = smul.addr %s308, 8
        %s310 = scalar_lea.vmem [#allocation7], %s309
        // Predicated region
        $region37: #{tpu_custom_call.1} parent=27 // pred_check
          %p311 = pneg %p108
        $region38: #{tpu_custom_call.1} parent=27 // pred_check_branch
          %313 = sbr.rel (%p311) target = $region40
        $region39: #{tpu_custom_call.1} parent=27 // pred_region
          %s315 = ssub.s32 128, 128
          %316 = vsyncadd %s307, %s315
          %s317 = sadd.s32 %s27, %s26
          %s318 = smul.addr %s317, 128
          %s319 = scalar_lea.hbm %s2, %s318
          %s321 = sshll.u32 %s310, 4
          %s322 = int_to_ptr.vmem [resolvable:$true] %s321
          %324 = dma.vmem_to_hbm [thread:$0]  %s322, 128, %s319, %s307
        $region40: #{tpu_custom_call.1} parent=27 // pred_fallthru
          _
      $region28: #{tpu_custom_call.1} parent=5 // pred_fallthru
        _
      %p325 = scmp.le.s32.totalorder 2, %s17
      // Predicated region
      $region41: #{tpu_custom_call.1} parent=5 // pred_check
        %p326 = pneg %p325
      $region42: #{tpu_custom_call.1} parent=5 // pred_check_branch
        %328 = sbr.rel (%p326) target = $region44
      $region43: #{tpu_custom_call.1} parent=5 // pred_region
        %s329 = ssub.s32 %s17, 2
        // Predicated region
        $region45: #{tpu_custom_call.1} parent=43 // pred_check
          %p330 = pneg %p114
        $region46: #{tpu_custom_call.1} parent=43 // pred_check_branch
          %332 = sbr.rel (%p330) target = $region48
        $region47: #{tpu_custom_call.1} parent=43 // pred_region
          %s333 = sand.u32 %s99, 1
          %s334 = scalar_lea.sflag [#allocation4], %s333
          %s335 = sand.u32 %s99, 1
          %s336 = smul.addr %s335, 8
          %s337 = scalar_lea.vmem [#allocation7], %s336
          %338 = dma.done %s334, 128
        $region48: #{tpu_custom_call.1} parent=43 // pred_fallthru
          _
      $region44: #{tpu_custom_call.1} parent=5 // pred_fallthru
        _
    $region6: #{tpu_custom_call.1} parent=1 // loop_footer
      %s21 = sadd.s32 1, %s17
    $region7: #{tpu_custom_call.1} parent=1 // loop_footer_branch
      %16 = sbr.rel target = $region3
    $region8: #{tpu_custom_call.1} parent=1 // loop_exit
      _
    %339 = vsyncpa [#allocation3], 1
    %s340 = scalar_lea.sflag [#allocation3], 1
    %341 = vsyncpa %s340, 1
    %342 = vsyncpa [#allocation6], 1
    %s343 = scalar_lea.sflag [#allocation6], 1
    %344 = vsyncpa %s343, 1
    %345 = vsyncpa [#allocation4], 1
    %s346 = scalar_lea.sflag [#allocation4], 1
    %347 = vsyncpa %s346, 1

</llo_original>
